<compile_context>
chip_gen: v6e
topology: v6e:2x2x1
jax: 0.10.0
libtpu: 0.0.40
codegen_flags: <defaults>
</compile_context>

<pallas_src>
import numpy as np
import jax
import jax.numpy as jnp
from jax.experimental import pallas as pl
from jax.experimental.pallas import tpu as pltpu


# ----------------------------------------------------------------------------
# Primary path: zero-traffic pass-through (ANY refs + input/output aliasing).
# ----------------------------------------------------------------------------
def _passthrough_kernel(x_hbm_ref, o_hbm_ref):
    # Output aliases the input HBM buffer (input_output_aliases={0: 0}); no
    # DMA descriptors and no vector slots are issued.  touch() registers a
    # fake read+write dep so the aliased output is considered produced here
    # and nothing reorders around / eliminates this call.
    del x_hbm_ref
    pltpu.touch(o_hbm_ref)


def _zero_copy_passthrough(x2d):
    rows, h = x2d.shape
    return pl.pallas_call(
        _passthrough_kernel,
        out_shape=jax.ShapeDtypeStruct((rows, h), x2d.dtype),
        in_specs=[pl.BlockSpec(memory_space=pl.ANY)],
        out_specs=pl.BlockSpec(memory_space=pl.ANY),
        input_output_aliases={0: 0},
        compiler_params=pltpu.CompilerParams(has_side_effects=True),
    )(x2d)


# ----------------------------------------------------------------------------
# Fallback path: real data movement, S-tiled so in/out DMAs overlap.
# ----------------------------------------------------------------------------
def _copy_kernel(x_ref, o_ref):
    # Lane-dense (tile_s, 768) copy: full-vreg unmasked stores only.
    o_ref[...] = x_ref[...]


def _tiled_copy(x2d, tile_s=128):
    rows, h = x2d.shape
    grid = (pl.cdiv(rows, tile_s),)
    return pl.pallas_call(
        _copy_kernel,
        out_shape=jax.ShapeDtypeStruct((rows, h), x2d.dtype),
        grid=grid,
        in_specs=[pl.BlockSpec((tile_s, h), lambda i: (i, 0))],
        out_specs=pl.BlockSpec((tile_s, h), lambda i: (i, 0)),
        compiler_params=pltpu.CompilerParams(
            # Tiny (~1.1 MiB) copy: do not shard it across v7x's two TCs.
            dimension_semantics=("arbitrary",),
        ),
    )(x2d)


# ----------------------------------------------------------------------------
# Module forward.
# ----------------------------------------------------------------------------
def m_forward(x494, x492):
    """JAX/Pallas equivalent of M.forward.

    x494: tuple of leading dims, e.g. (1, 384)
    x492: jnp.ndarray of shape x494 + (768,)
    """
    # x495 = operator.add(x494, (12, 64))  -- plain tuple concatenation
    x495 = tuple(x494) + (12, 64)
    b, s, nh, hd = x495
    h = nh * hd
    assert x492.shape == (b, s, h), f"expected {(b, s, h)}, got {x492.shape}"

    # Metadata-only flatten to a clean 2-D lane-dense slab before the call.
    x2d = jnp.reshape(x492, (b * s, h))

    try:
        flat = _zero_copy_passthrough(x2d)
    except Exception:
        # Toolchain rejected the zero-copy variant; fall back to a pipelined,
        # S-tiled copy (still correct, still lane-dense).
        flat = _tiled_copy(x2d)

    # The (12, 64) head split only splits trailing contiguous dims of a
    # lane-dense array -> metadata-only reshape, zero HBM traffic.
    return jnp.reshape(flat, x495)


if __name__ == "__main__":
    key = jax.random.PRNGKey(0)
    # Shapes implied by the module: x492 = [1, 384, 768], x494 = (1, 384)
    x492 = jax.random.normal(key, (1, 384, 768), dtype=jnp.float32)
    x494 = (1, 384)

    # Host-side reference computed BEFORE the (possibly aliasing) kernel call.
    ref = np.asarray(x492).reshape(1, 384, 12, 64)

    x496 = m_forward(x494, x492)
    x496 = jax.block_until_ready(x496)

    assert x496.shape == (1, 384, 12, 64), x496.shape
    assert x496.dtype == jnp.float32, x496.dtype
    assert np.array_equal(np.asarray(x496), ref)

    print("KERNEL_OK")
</pallas_src>

<mosaic_0001>
module attributes {stable_mosaic.version = 11 : i64} {
  func.func @_passthrough_kernel(%arg0: memref<384x768xf32, #tpu.memory_space<any>>, %arg1: memref<384x768xf32, #tpu.memory_space<any>>) attributes {dimension_semantics = [], scalar_prefetch = 0 : i64, scratch_operands = 0 : i64, tpu.core_type = #tpu.core_type<tc>} {
    return
  }
}

module attributes {stable_mosaic.version = 11 : i64} {
  func.func @_copy_kernel(%arg0: i32, %arg1: memref<128x768xf32, #tpu.memory_space<vmem>>, %arg2: memref<128x768xf32, #tpu.memory_space<vmem>>) attributes {dimension_semantics = [#tpu.dimension_semantics<arbitrary>], iteration_bounds = array<i64: 3>, scalar_prefetch = 0 : i64, scratch_operands = 0 : i64, tpu.core_type = #tpu.core_type<tc>, window_params = [{transform_indices = @transform_0, window_bounds = array<i64: 128, 768>}, {transform_indices = @transform_1, window_bounds = array<i64: 128, 768>}]} {
    %c0 = arith.constant 0 : index
    %c0_0 = arith.constant 0 : index
    %0 = vector.load %arg1[%c0, %c0_0] : memref<128x768xf32, #tpu.memory_space<vmem>>, vector<128x768xf32>
    %c0_1 = arith.constant 0 : index
    %c0_2 = arith.constant 0 : index
    %1 = vector.load %arg2[%c0_1, %c0_2] : memref<128x768xf32, #tpu.memory_space<vmem>>, vector<128x768xf32>
    tpu.vector_store %arg2[%c0_1, %c0_2], %0 {strides = array<i32>} : memref<128x768xf32, #tpu.memory_space<vmem>>, vector<128x768xf32>,
    return
  }
  func.func @transform_0(%arg0: i32) -> (i32, i32) {
    %c0_i32 = arith.constant 0 : i32
    %c0_i32_0 = arith.constant 0 : i32
    return %arg0, %c0_i32 : i32, i32
  }
  func.func @transform_1(%arg0: i32) -> (i32, i32) {
    %c0_i32 = arith.constant 0 : i32
    %c0_i32_0 = arith.constant 0 : i32
    return %arg0, %c0_i32 : i32, i32
  }
}

</mosaic_0001>

<llo_original>
// kernel: tpu_custom_call.1
$region0: #{tpu_custom_call.1}
  #allocation0 [shape = 'u32[]', space=smem, size = 0x4, offset = 0x4, fixed_abs, tag = 'smem constant byte address 0x4 - core index']
  #allocation1 [shape = 'u32[144,128]{1,0:T(1,128)}', space=vmem, size = 0x12000, scoped, tag = 'internal scratch']
  %s0 = inlined_call_operand.hbm [shape: f32[384,768], index: 0, kind: input, shape index: {}, may-alias: {0,1}]
  %s1 = inlined_call_operand.hbm [shape: f32[384,768], index: 1, kind: output, shape index: {}, may-alias: {0,1}]
  %s2 = sld [smem:[#allocation0]]
  $region2: #{tpu_custom_call.1} parent=0
    _
  %s4 = ssub.s32 1, %s2
  %s5 = scalar_select 0, %s4, %s2

// kernel: tpu_custom_call.1
$region0: #{tpu_custom_call.1}
  #allocation0 [shape = 'u32[]', space=smem, size = 0x4, offset = 0x4, fixed_abs, tag = 'smem constant byte address 0x4 - core index']
  #allocation1 [shape = 'u32[144,128]{1,0:T(1,128)}', space=vmem, size = 0x12000, scoped, tag = 'internal scratch']
  %s0 = inlined_call_operand.hbm [shape: f32[384,768], index: 0, kind: input, shape index: {}]
  %s1 = inlined_call_operand.hbm [shape: f32[384,768], index: 1, kind: output, shape index: {}]
  %s2 = sld [smem:[#allocation0]]
  $region41: #{tpu_custom_call.1} parent=0
    _
  %s4 = ssub.s32 1, %s2
  %s5 = scalar_select 0, %s4, %s2
  $region1: #{tpu_custom_call.1} parent=0
    #allocation2 [shape = 'u8[786432]{0}', space=vmem, size = 0xc0000, scoped, tag = 'input window, operand 0']
    #allocation3 [shape = 's32[2]{0}', space=sflag, size = 0x8, scoped, tag = 'scoped memory for tpu_custom_call.1']
    #allocation4 [shape = 's32[2]{0}', space=sflag, size = 0x8, scoped, tag = 'scoped memory for tpu_custom_call.1']
    #allocation5 [shape = 'u8[786432]{0}', space=vmem, size = 0xc0000, scoped, tag = 'output window, operand 0']
    %6 = vsyncpa [#allocation3], 0
    %s7 = scalar_lea.sflag [#allocation3], 1
    %8 = vsyncpa %s7, 0
    %9 = vsyncpa [#allocation4], 0
    %s10 = scalar_lea.sflag [#allocation4], 1
    %11 = vsyncpa %s10, 0
    loop: start=0, step=1, limit=5
    $region2: #{tpu_custom_call.1} parent=1 // loop_pre_header
      _
    $region3: #{tpu_custom_call.1} parent=1 // loop_header
      %s13 = sphi 0, %s17
      %p14 = scmp.ge.s32.totalorder %s13, 5
      %s23 = sphi 0, %s25
      %s26 = sphi 0, %s23
      %s27 = sphi 0, %s26
      %s43 = sphi 0, %s27
      %s49 = sphi 0, %s51
      %s52 = sphi 0, %s49
      %s53 = sphi 0, %s52
      %s69 = sphi 0, %s53
    $region4: #{tpu_custom_call.1} parent=1 // loop_header_branch
      %16 = sbr.rel (%p14) target = $region8
    $region5: #{tpu_custom_call.1} parent=1 // loop_body
      %s18 = ssub.s32 %s13, 1
      %s19 = ssub.s32 %s13, 2
      %s20 = sadd.s32 %s13, 1
      %s21 = ssub.s32 %s13, %s20
      %p22 = scmp.eq.s32.totalorder %s21, 0
      %s24 = sadd.s32 %s23, 1
      %s25 = scalar_select %p22, %s23, %s24
      %p28 = pneg %p22
      %p29 = scmp.eq.s32.totalorder %s13, 2
      %p30 = por %p28, %p29
      %p31 = scmp.ne.s32.totalorder %s23, %s26
      %p32 = scmp.eq.s32.totalorder %s13, 0
      %p33 = por %p31, %p32
      %p34 = scmp.ne.s32.totalorder %s23, %s26
      %p35 = scmp.eq.s32.totalorder %s18, 2
      %p36 = por %p34, %p35
      %p37 = scmp.ne.s32.totalorder %s26, %s27
      %p38 = scmp.eq.s32.totalorder %s18, 0
      %p39 = por %p37, %p38
      %p40 = scmp.ne.s32.totalorder %s26, %s27
      %p41 = scmp.eq.s32.totalorder %s19, 2
      %p42 = por %p40, %p41
      %p44 = scmp.ne.s32.totalorder %s27, %s43
      %p45 = scmp.eq.s32.totalorder %s19, 0
      %p46 = por %p44, %p45
      %s47 = ssub.s32 %s13, %s20
      %p48 = scmp.eq.s32.totalorder %s47, 0
      %s50 = sadd.s32 %s49, 1
      %s51 = scalar_select %p48, %s49, %s50
      %p54 = pneg %p48
      %p55 = scmp.eq.s32.totalorder %s13, 2
      %p56 = por %p54, %p55
      %p57 = scmp.ne.s32.totalorder %s49, %s52
      %p58 = scmp.eq.s32.totalorder %s13, 0
      %p59 = por %p57, %p58
      %p60 = scmp.ne.s32.totalorder %s49, %s52
      %p61 = scmp.eq.s32.totalorder %s18, 2
      %p62 = por %p60, %p61
      %p63 = scmp.ne.s32.totalorder %s52, %s53
      %p64 = scmp.eq.s32.totalorder %s18, 0
      %p65 = por %p63, %p64
      %p66 = scmp.ne.s32.totalorder %s52, %s53
      %p67 = scmp.eq.s32.totalorder %s19, 2
      %p68 = por %p66, %p67
      %p70 = scmp.ne.s32.totalorder %s53, %s69
      %p71 = scmp.eq.s32.totalorder %s19, 0
      %p72 = por %p70, %p71
      %p73 = scmp.le.s32.totalorder 1, %s13
      %p74 = scmp.lt.s32.totalorder %s13, 4
      %p75 = pnand %p73, %p74
      %p76 = pneg %p75
      // Predicated region
      $region9: #{tpu_custom_call.1} parent=5 // pred_check
        _
      $region10: #{tpu_custom_call.1} parent=5 // pred_check_branch
        %78 = sbr.rel (%p75) target = $region12
      $region11: #{tpu_custom_call.1} parent=5 // pred_region
        %s79 = ssub.s32 %s13, 1
      $region12: #{tpu_custom_call.1} parent=5 // pred_fallthru
        _
      %p80 = scmp.lt.s32.totalorder %s13, 3
      // Predicated region
      $region13: #{tpu_custom_call.1} parent=5 // pred_check
        %p81 = pneg %p80
      $region14: #{tpu_custom_call.1} parent=5 // pred_check_branch
        %83 = sbr.rel (%p81) target = $region16
      $region15: #{tpu_custom_call.1} parent=5 // pred_region
        // Predicated region
        $region17: #{tpu_custom_call.1} parent=15 // pred_check
          %p84 = pneg %p33
        $region18: #{tpu_custom_call.1} parent=15 // pred_check_branch
          %86 = sbr.rel (%p84) target = $region20
        $region19: #{tpu_custom_call.1} parent=15 // pred_region
          %s87 = sand.u32 %s23, 1
          %s88 = scalar_lea.sflag [#allocation3], %s87
          %s89 = sand.u32 %s23, 1
          %s90 = smul.addr %s89, 768
          %s91 = scalar_lea.vmem [#allocation2], %s90
          %s92 = smul.u32 16, %s13
          %s94 = ssub.s32 12288, 12288
          %95 = vsyncadd %s88, %s94
          %s96 = smul.addr %s92, 6
          %s97 = smul.addr %s96, 128
          %s98 = scalar_lea.hbm %s0, %s97
          %s99 = sshll.u32 %s91, 4
          %s100 = int_to_ptr.vmem [resolvable:$true] %s99
          %105 = dma.hbm_to_vmem [thread:$0]  %s98, 12288, %s100, %s88, 768, 768, 48
        $region20: #{tpu_custom_call.1} parent=15 // pred_fallthru
          _
      $region16: #{tpu_custom_call.1} parent=5 // pred_fallthru
        _
      %p106 = scmp.le.s32.totalorder 1, %s13
      %p107 = scmp.lt.s32.totalorder %s13, 4
      %p108 = pnand %p106, %p107
      %p109 = pneg %p108
      // Predicated region
      $region21: #{tpu_custom_call.1} parent=5 // pred_check
        _
      $region22: #{tpu_custom_call.1} parent=5 // pred_check_branch
        %111 = sbr.rel (%p108) target = $region24
      $region23: #{tpu_custom_call.1} parent=5 // pred_region
        %s112 = ssub.s32 %s13, 1
        %s113 = sand.u32 %s26, 1
        %s114 = scalar_lea.sflag [#allocation3], %s113
        %s115 = sand.u32 %s26, 1
        %s116 = smul.addr %s115, 768
        %s117 = scalar_lea.vmem [#allocation2], %s116
        // Predicated region
        $region25: #{tpu_custom_call.1} parent=23 // pred_check
          %p118 = pneg %p39
        $region26: #{tpu_custom_call.1} parent=23 // pred_check_branch
          %120 = sbr.rel (%p118) target = $region28
        $region27: #{tpu_custom_call.1} parent=23 // pred_region
          %121 = dma.done %s114, 12288
        $region28: #{tpu_custom_call.1} parent=23 // pred_fallthru
          _
        %s122 = sand.u32 %s26, 1
        %s123 = scalar_lea.sflag [#allocation3], %s122
        %s124 = sand.u32 %s26, 1
        %s125 = smul.addr %s124, 768
        %s126 = scalar_lea.vmem [#allocation2], %s125
        %p127 = pneg %p39
        %p128 = pneg %p36
        %p129 = pneg %p65
        %p130 = pneg %p62
        %s131 = sand.u32 %s52, 1
        %s132 = scalar_lea.sflag [#allocation4], %s131
        %s133 = sand.u32 %s52, 1
        %s134 = smul.addr %s133, 768
        %s135 = scalar_lea.vmem [#allocation5], %s134
        %s136 = smul.u32 16, %s18
        %s137 = smul.u32 16, %s18
        %v138 = vld [vmem:[%s117] sm:$0xff]
        %v139 = vld [vmem:[%s117 + $0x8] sm:$0xff]
        %v140 = vld [vmem:[%s117 + $0x10] sm:$0xff]
        %v141 = vld [vmem:[%s117 + $0x18] sm:$0xff]
        %v142 = vld [vmem:[%s117 + $0x20] sm:$0xff]
        %v143 = vld [vmem:[%s117 + $0x28] sm:$0xff]
        %v144 = vld [vmem:[%s117 + $0x30] sm:$0xff]
        %v145 = vld [vmem:[%s117 + $0x38] sm:$0xff]
        %v146 = vld [vmem:[%s117 + $0x40] sm:$0xff]
        %v147 = vld [vmem:[%s117 + $0x48] sm:$0xff]
        %v148 = vld [vmem:[%s117 + $0x50] sm:$0xff]
        %v149 = vld [vmem:[%s117 + $0x58] sm:$0xff]
        %v150 = vld [vmem:[%s117 + $0x60] sm:$0xff]
        %v151 = vld [vmem:[%s117 + $0x68] sm:$0xff]
        %v152 = vld [vmem:[%s117 + $0x70] sm:$0xff]
        %v153 = vld [vmem:[%s117 + $0x78] sm:$0xff]
        %v154 = vld [vmem:[%s117 + $0x80] sm:$0xff]
        %v155 = vld [vmem:[%s117 + $0x88] sm:$0xff]
        %v156 = vld [vmem:[%s117 + $0x90] sm:$0xff]
        %v157 = vld [vmem:[%s117 + $0x98] sm:$0xff]
        %v158 = vld [vmem:[%s117 + $0xa0] sm:$0xff]
        %v159 = vld [vmem:[%s117 + $0xa8] sm:$0xff]
        %v160 = vld [vmem:[%s117 + $0xb0] sm:$0xff]
        %v161 = vld [vmem:[%s117 + $0xb8] sm:$0xff]
        %v162 = vld [vmem:[%s117 + $0xc0] sm:$0xff]
        %v163 = vld [vmem:[%s117 + $0xc8] sm:$0xff]
        %v164 = vld [vmem:[%s117 + $0xd0] sm:$0xff]
        %v165 = vld [vmem:[%s117 + $0xd8] sm:$0xff]
        %v166 = vld [vmem:[%s117 + $0xe0] sm:$0xff]
        %v167 = vld [vmem:[%s117 + $0xe8] sm:$0xff]
        %v168 = vld [vmem:[%s117 + $0xf0] sm:$0xff]
        %v169 = vld [vmem:[%s117 + $0xf8] sm:$0xff]
        %v170 = vld [vmem:[%s117 + $0x100] sm:$0xff]
        %v171 = vld [vmem:[%s117 + $0x108] sm:$0xff]
        %v172 = vld [vmem:[%s117 + $0x110] sm:$0xff]
        %v173 = vld [vmem:[%s117 + $0x118] sm:$0xff]
        %v174 = vld [vmem:[%s117 + $0x120] sm:$0xff]
        %v175 = vld [vmem:[%s117 + $0x128] sm:$0xff]
        %v176 = vld [vmem:[%s117 + $0x130] sm:$0xff]
        %v177 = vld [vmem:[%s117 + $0x138] sm:$0xff]
        %v178 = vld [vmem:[%s117 + $0x140] sm:$0xff]
        %v179 = vld [vmem:[%s117 + $0x148] sm:$0xff]
        %v180 = vld [vmem:[%s117 + $0x150] sm:$0xff]
        %v181 = vld [vmem:[%s117 + $0x158] sm:$0xff]
        %v182 = vld [vmem:[%s117 + $0x160] sm:$0xff]
        %v183 = vld [vmem:[%s117 + $0x168] sm:$0xff]
        %v184 = vld [vmem:[%s117 + $0x170] sm:$0xff]
        %v185 = vld [vmem:[%s117 + $0x178] sm:$0xff]
        %v186 = vld [vmem:[%s117 + $0x180] sm:$0xff]
        %v187 = vld [vmem:[%s117 + $0x188] sm:$0xff]
        %v188 = vld [vmem:[%s117 + $0x190] sm:$0xff]
        %v189 = vld [vmem:[%s117 + $0x198] sm:$0xff]
        %v190 = vld [vmem:[%s117 + $0x1a0] sm:$0xff]
        %v191 = vld [vmem:[%s117 + $0x1a8] sm:$0xff]
        %v192 = vld [vmem:[%s117 + $0x1b0] sm:$0xff]
        %v193 = vld [vmem:[%s117 + $0x1b8] sm:$0xff]
        %v194 = vld [vmem:[%s117 + $0x1c0] sm:$0xff]
        %v195 = vld [vmem:[%s117 + $0x1c8] sm:$0xff]
        %v196 = vld [vmem:[%s117 + $0x1d0] sm:$0xff]
        %v197 = vld [vmem:[%s117 + $0x1d8] sm:$0xff]
        %v198 = vld [vmem:[%s117 + $0x1e0] sm:$0xff]
        %v199 = vld [vmem:[%s117 + $0x1e8] sm:$0xff]
        %v200 = vld [vmem:[%s117 + $0x1f0] sm:$0xff]
        %v201 = vld [vmem:[%s117 + $0x1f8] sm:$0xff]
        %v202 = vld [vmem:[%s117 + $0x200] sm:$0xff]
        %v203 = vld [vmem:[%s117 + $0x208] sm:$0xff]
        %v204 = vld [vmem:[%s117 + $0x210] sm:$0xff]
        %v205 = vld [vmem:[%s117 + $0x218] sm:$0xff]
        %v206 = vld [vmem:[%s117 + $0x220] sm:$0xff]
        %v207 = vld [vmem:[%s117 + $0x228] sm:$0xff]
        %v208 = vld [vmem:[%s117 + $0x230] sm:$0xff]
        %v209 = vld [vmem:[%s117 + $0x238] sm:$0xff]
        %v210 = vld [vmem:[%s117 + $0x240] sm:$0xff]
        %v211 = vld [vmem:[%s117 + $0x248] sm:$0xff]
        %v212 = vld [vmem:[%s117 + $0x250] sm:$0xff]
        %v213 = vld [vmem:[%s117 + $0x258] sm:$0xff]
        %v214 = vld [vmem:[%s117 + $0x260] sm:$0xff]
        %v215 = vld [vmem:[%s117 + $0x268] sm:$0xff]
        %v216 = vld [vmem:[%s117 + $0x270] sm:$0xff]
        %v217 = vld [vmem:[%s117 + $0x278] sm:$0xff]
        %v218 = vld [vmem:[%s117 + $0x280] sm:$0xff]
        %v219 = vld [vmem:[%s117 + $0x288] sm:$0xff]
        %v220 = vld [vmem:[%s117 + $0x290] sm:$0xff]
        %v221 = vld [vmem:[%s117 + $0x298] sm:$0xff]
        %v222 = vld [vmem:[%s117 + $0x2a0] sm:$0xff]
        %v223 = vld [vmem:[%s117 + $0x2a8] sm:$0xff]
        %v224 = vld [vmem:[%s117 + $0x2b0] sm:$0xff]
        %v225 = vld [vmem:[%s117 + $0x2b8] sm:$0xff]
        %v226 = vld [vmem:[%s117 + $0x2c0] sm:$0xff]
        %v227 = vld [vmem:[%s117 + $0x2c8] sm:$0xff]
        %v228 = vld [vmem:[%s117 + $0x2d0] sm:$0xff]
        %v229 = vld [vmem:[%s117 + $0x2d8] sm:$0xff]
        %v230 = vld [vmem:[%s117 + $0x2e0] sm:$0xff]
        %v231 = vld [vmem:[%s117 + $0x2e8] sm:$0xff]
        %v232 = vld [vmem:[%s117 + $0x2f0] sm:$0xff]
        %v233 = vld [vmem:[%s117 + $0x2f8] sm:$0xff]
        %234 = vst [vmem:[%s135] sm:$0xff] %v138
        %235 = vst [vmem:[%s135 + $0x8] sm:$0xff] %v139
        %236 = vst [vmem:[%s135 + $0x10] sm:$0xff] %v140
        %237 = vst [vmem:[%s135 + $0x18] sm:$0xff] %v141
        %238 = vst [vmem:[%s135 + $0x20] sm:$0xff] %v142
        %239 = vst [vmem:[%s135 + $0x28] sm:$0xff] %v143
        %240 = vst [vmem:[%s135 + $0x30] sm:$0xff] %v144
        %241 = vst [vmem:[%s135 + $0x38] sm:$0xff] %v145
        %242 = vst [vmem:[%s135 + $0x40] sm:$0xff] %v146
        %243 = vst [vmem:[%s135 + $0x48] sm:$0xff] %v147
        %244 = vst [vmem:[%s135 + $0x50] sm:$0xff] %v148
        %245 = vst [vmem:[%s135 + $0x58] sm:$0xff] %v149
        %246 = vst [vmem:[%s135 + $0x60] sm:$0xff] %v150
        %247 = vst [vmem:[%s135 + $0x68] sm:$0xff] %v151
        %248 = vst [vmem:[%s135 + $0x70] sm:$0xff] %v152
        %249 = vst [vmem:[%s135 + $0x78] sm:$0xff] %v153
        %250 = vst [vmem:[%s135 + $0x80] sm:$0xff] %v154
        %251 = vst [vmem:[%s135 + $0x88] sm:$0xff] %v155
        %252 = vst [vmem:[%s135 + $0x90] sm:$0xff] %v156
        %253 = vst [vmem:[%s135 + $0x98] sm:$0xff] %v157
        %254 = vst [vmem:[%s135 + $0xa0] sm:$0xff] %v158
        %255 = vst [vmem:[%s135 + $0xa8] sm:$0xff] %v159
        %256 = vst [vmem:[%s135 + $0xb0] sm:$0xff] %v160
        %257 = vst [vmem:[%s135 + $0xb8] sm:$0xff] %v161
        %258 = vst [vmem:[%s135 + $0xc0] sm:$0xff] %v162
        %259 = vst [vmem:[%s135 + $0xc8] sm:$0xff] %v163
        %260 = vst [vmem:[%s135 + $0xd0] sm:$0xff] %v164
        %261 = vst [vmem:[%s135 + $0xd8] sm:$0xff] %v165
        %262 = vst [vmem:[%s135 + $0xe0] sm:$0xff] %v166
        %263 = vst [vmem:[%s135 + $0xe8] sm:$0xff] %v167
        %264 = vst [vmem:[%s135 + $0xf0] sm:$0xff] %v168
        %265 = vst [vmem:[%s135 + $0xf8] sm:$0xff] %v169
        %266 = vst [vmem:[%s135 + $0x100] sm:$0xff] %v170
        %267 = vst [vmem:[%s135 + $0x108] sm:$0xff] %v171
        %268 = vst [vmem:[%s135 + $0x110] sm:$0xff] %v172
        %269 = vst [vmem:[%s135 + $0x118] sm:$0xff] %v173
        %270 = vst [vmem:[%s135 + $0x120] sm:$0xff] %v174
        %271 = vst [vmem:[%s135 + $0x128] sm:$0xff] %v175
        %272 = vst [vmem:[%s135 + $0x130] sm:$0xff] %v176
        %273 = vst [vmem:[%s135 + $0x138] sm:$0xff] %v177
        %274 = vst [vmem:[%s135 + $0x140] sm:$0xff] %v178
        %275 = vst [vmem:[%s135 + $0x148] sm:$0xff] %v179
        %276 = vst [vmem:[%s135 + $0x150] sm:$0xff] %v180
        %277 = vst [vmem:[%s135 + $0x158] sm:$0xff] %v181
        %278 = vst [vmem:[%s135 + $0x160] sm:$0xff] %v182
        %279 = vst [vmem:[%s135 + $0x168] sm:$0xff] %v183
        %280 = vst [vmem:[%s135 + $0x170] sm:$0xff] %v184
        %281 = vst [vmem:[%s135 + $0x178] sm:$0xff] %v185
        %282 = vst [vmem:[%s135 + $0x180] sm:$0xff] %v186
        %283 = vst [vmem:[%s135 + $0x188] sm:$0xff] %v187
        %284 = vst [vmem:[%s135 + $0x190] sm:$0xff] %v188
        %285 = vst [vmem:[%s135 + $0x198] sm:$0xff] %v189
        %286 = vst [vmem:[%s135 + $0x1a0] sm:$0xff] %v190
        %287 = vst [vmem:[%s135 + $0x1a8] sm:$0xff] %v191
        %288 = vst [vmem:[%s135 + $0x1b0] sm:$0xff] %v192
        %289 = vst [vmem:[%s135 + $0x1b8] sm:$0xff] %v193
        %290 = vst [vmem:[%s135 + $0x1c0] sm:$0xff] %v194
        %291 = vst [vmem:[%s135 + $0x1c8] sm:$0xff] %v195
        %292 = vst [vmem:[%s135 + $0x1d0] sm:$0xff] %v196
        %293 = vst [vmem:[%s135 + $0x1d8] sm:$0xff] %v197
        %294 = vst [vmem:[%s135 + $0x1e0] sm:$0xff] %v198
        %295 = vst [vmem:[%s135 + $0x1e8] sm:$0xff] %v199
        %296 = vst [vmem:[%s135 + $0x1f0] sm:$0xff] %v200
        %297 = vst [vmem:[%s135 + $0x1f8] sm:$0xff] %v201
        %298 = vst [vmem:[%s135 + $0x200] sm:$0xff] %v202
        %299 = vst [vmem:[%s135 + $0x208] sm:$0xff] %v203
        %300 = vst [vmem:[%s135 + $0x210] sm:$0xff] %v204
        %301 = vst [vmem:[%s135 + $0x218] sm:$0xff] %v205
        %302 = vst [vmem:[%s135 + $0x220] sm:$0xff] %v206
        %303 = vst [vmem:[%s135 + $0x228] sm:$0xff] %v207
        %304 = vst [vmem:[%s135 + $0x230] sm:$0xff] %v208
        %305 = vst [vmem:[%s135 + $0x238] sm:$0xff] %v209
        %306 = vst [vmem:[%s135 + $0x240] sm:$0xff] %v210
        %307 = vst [vmem:[%s135 + $0x248] sm:$0xff] %v211
        %308 = vst [vmem:[%s135 + $0x250] sm:$0xff] %v212
        %309 = vst [vmem:[%s135 + $0x258] sm:$0xff] %v213
        %310 = vst [vmem:[%s135 + $0x260] sm:$0xff] %v214
        %311 = vst [vmem:[%s135 + $0x268] sm:$0xff] %v215
        %312 = vst [vmem:[%s135 + $0x270] sm:$0xff] %v216
        %313 = vst [vmem:[%s135 + $0x278] sm:$0xff] %v217
        %314 = vst [vmem:[%s135 + $0x280] sm:$0xff] %v218
        %315 = vst [vmem:[%s135 + $0x288] sm:$0xff] %v219
        %316 = vst [vmem:[%s135 + $0x290] sm:$0xff] %v220
        %317 = vst [vmem:[%s135 + $0x298] sm:$0xff] %v221
        %318 = vst [vmem:[%s135 + $0x2a0] sm:$0xff] %v222
        %319 = vst [vmem:[%s135 + $0x2a8] sm:$0xff] %v223
        %320 = vst [vmem:[%s135 + $0x2b0] sm:$0xff] %v224
        %321 = vst [vmem:[%s135 + $0x2b8] sm:$0xff] %v225
        %322 = vst [vmem:[%s135 + $0x2c0] sm:$0xff] %v226
        %323 = vst [vmem:[%s135 + $0x2c8] sm:$0xff] %v227
        %324 = vst [vmem:[%s135 + $0x2d0] sm:$0xff] %v228
        %325 = vst [vmem:[%s135 + $0x2d8] sm:$0xff] %v229
        %326 = vst [vmem:[%s135 + $0x2e0] sm:$0xff] %v230
        %327 = vst [vmem:[%s135 + $0x2e8] sm:$0xff] %v231
        %328 = vst [vmem:[%s135 + $0x2f0] sm:$0xff] %v232
        %329 = vst [vmem:[%s135 + $0x2f8] sm:$0xff] %v233
        %s330 = sand.u32 %s52, 1
        %s331 = scalar_lea.sflag [#allocation4], %s330
        %s332 = sand.u32 %s52, 1
        %s333 = smul.addr %s332, 768
        %s334 = scalar_lea.vmem [#allocation5], %s333
        // Predicated region
        $region29: #{tpu_custom_call.1} parent=23 // pred_check
          %p335 = pneg %p62
        $region30: #{tpu_custom_call.1} parent=23 // pred_check_branch
          %337 = sbr.rel (%p335) target = $region32
        $region31: #{tpu_custom_call.1} parent=23 // pred_region
          %s338 = smul.u32 16, %s18
          %s340 = ssub.s32 12288, 12288
          %341 = vsyncadd %s331, %s340
          %s342 = smul.addr %s338, 6
          %s343 = smul.addr %s342, 128
          %s344 = scalar_lea.hbm %s1, %s343
          %s345 = sshll.u32 %s334, 4
          %s346 = int_to_ptr.vmem [resolvable:$true] %s345
          %351 = dma.vmem_to_hbm [thread:$0]  %s346, 12288, %s344, %s331, 768, 768, 48
        $region32: #{tpu_custom_call.1} parent=23 // pred_fallthru
          _
      $region24: #{tpu_custom_call.1} parent=5 // pred_fallthru
        _
      %p352 = scmp.le.s32.totalorder 2, %s13
      // Predicated region
      $region33: #{tpu_custom_call.1} parent=5 // pred_check
        %p353 = pneg %p352
      $region34: #{tpu_custom_call.1} parent=5 // pred_check_branch
        %355 = sbr.rel (%p353) target = $region36
      $region35: #{tpu_custom_call.1} parent=5 // pred_region
        %s356 = ssub.s32 %s13, 2
        // Predicated region
        $region37: #{tpu_custom_call.1} parent=35 // pred_check
          %p357 = pneg %p68
        $region38: #{tpu_custom_call.1} parent=35 // pred_check_branch
          %359 = sbr.rel (%p357) target = $region40
        $region39: #{tpu_custom_call.1} parent=35 // pred_region
          %s360 = sand.u32 %s53, 1
          %s361 = scalar_lea.sflag [#allocation4], %s360
          %s362 = sand.u32 %s53, 1
          %s363 = smul.addr %s362, 768
          %s364 = scalar_lea.vmem [#allocation5], %s363
          %365 = dma.done %s361, 12288
        $region40: #{tpu_custom_call.1} parent=35 // pred_fallthru
          _
      $region36: #{tpu_custom_call.1} parent=5 // pred_fallthru
        _
    $region6: #{tpu_custom_call.1} parent=1 // loop_footer
      %s17 = sadd.s32 1, %s13
    $region7: #{tpu_custom_call.1} parent=1 // loop_footer_branch
      %12 = sbr.rel target = $region3
    $region8: #{tpu_custom_call.1} parent=1 // loop_exit
      _
    %366 = vsyncpa [#allocation3], 1
    %s367 = scalar_lea.sflag [#allocation3], 1
    %368 = vsyncpa %s367, 1
    %369 = vsyncpa [#allocation4], 1
    %s370 = scalar_lea.sflag [#allocation4], 1
    %371 = vsyncpa %s370, 1

</llo_original>
